<compile_context>
chip_gen: v7x
topology: tpu7x:2x2x1
jax: 0.10.0
libtpu: 0.0.40
codegen_flags: <defaults>
</compile_context>

<pallas_src>
import math
import functools

import jax
import jax.numpy as jnp
from jax.experimental import pallas as pl
from jax.experimental.pallas import tpu as pltpu


# ---------------------------------------------------------------------------
# Parameter setup (plain-JAX glue): sinusoidal PE, exactly as PyTorch __init__.
# ---------------------------------------------------------------------------
def make_positional_encoding(max_len: int, d_model: int) -> jax.Array:
    position = jnp.arange(0, max_len, dtype=jnp.float32)[:, None]           # (L, 1)
    div_term = jnp.exp(
        jnp.arange(0, d_model, 2, dtype=jnp.float32) * (-math.log(10000.0) / d_model)
    )                                                                        # (D/2,)
    pe = jnp.zeros((max_len, d_model), dtype=jnp.float32)
    pe = pe.at[:, 0::2].set(jnp.sin(position * div_term))
    pe = pe.at[:, 1::2].set(jnp.cos(position * div_term))
    return pe[:, None, :]                                                    # (L, 1, D)


# ---------------------------------------------------------------------------
# Pallas kernels (2-D lane-dense view: rows = S, lanes = B*D)
# ---------------------------------------------------------------------------
def _pe_add_kernel(x_ref, pe_ref, o_ref):
    # Eval mode: dropout is identity -> pure elementwise add.
    o_ref[...] = (x_ref[...] + pe_ref[...]).astype(o_ref.dtype)


def _pe_add_dropout_kernel(x_ref, pe_ref, u_ref, o_ref, *, p: float):
    # Training mode: inverted dropout.  u in [0, 1); keep where u >= p.
    y = x_ref[...] + pe_ref[...]
    keep = u_ref[...] >= jnp.float32(p)
    scale = jnp.float32(1.0 / (1.0 - p))
    o_ref[...] = jnp.where(keep, y * scale, jnp.zeros_like(y)).astype(o_ref.dtype)


# ---------------------------------------------------------------------------
# Wrapper
# ---------------------------------------------------------------------------
def _pick_block_rows(seq_len: int, lane_width: int, itemsize: int,
                     target_bytes: int = 2 << 20) -> int:
    """Rows per grid step: multiple of 8, ~2 MiB per tile buffer, capped at 1024."""
    rows = (target_bytes // max(1, lane_width * itemsize)) // 8 * 8
    rows = int(max(8, min(rows, 1024)))
    if rows >= seq_len:
        return seq_len            # full extent -> always a legal block shape
    return rows


def positional_encoding_forward(x: jax.Array,
                                pe: jax.Array,
                                *,
                                p: float = 0.1,
                                training: bool = False,
                                rng_key: jax.Array | None = None) -> jax.Array:
    """x: (S, B, D); pe: (max_len, 1, D).  Returns dropout(x + pe[:S])."""
    S, B, D = x.shape
    BD = B * D
    dtype = x.dtype

    if training and p >= 1.0:
        # nn.Dropout(p=1.0) zeroes everything (avoids inf scale / threshold wrap).
        return jnp.zeros_like(x)

    # Lane-dense 2-D views; pe is broadcast over batch once (tiny, one-time).
    x2 = x.reshape(S, BD)
    pe2 = jnp.broadcast_to(pe[:S].astype(dtype), (S, B, D)).reshape(S, BD)

    TS = _pick_block_rows(S, BD, jnp.dtype(dtype).itemsize)
    grid = (pl.cdiv(S, TS),)
    row_spec = pl.BlockSpec((TS, BD), lambda i: (i, 0))

    compiler_params = pltpu.CompilerParams(
        dimension_semantics=("parallel",),          # shards rows across TCs on v7x
        vmem_limit_bytes=32 * 1024 * 1024,          # lifts v5e's 16 MiB scoped default
    )

    if training and p > 0.0:
        if rng_key is None:
            rng_key = jax.random.PRNGKey(0)
        u = jax.random.uniform(rng_key, (S, BD), dtype=jnp.float32)
        kernel = functools.partial(_pe_add_dropout_kernel, p=float(p))
        out2 = pl.pallas_call(
            kernel,
            out_shape=jax.ShapeDtypeStruct((S, BD), dtype),
            grid=grid,
            in_specs=[row_spec, row_spec, row_spec],
            out_specs=row_spec,
            compiler_params=compiler_params,
        )(x2, pe2, u)
    else:
        out2 = pl.pallas_call(
            _pe_add_kernel,
            out_shape=jax.ShapeDtypeStruct((S, BD), dtype),
            grid=grid,
            in_specs=[row_spec, row_spec],
            out_specs=row_spec,
            compiler_params=compiler_params,
        )(x2, pe2)

    return out2.reshape(S, B, D)


# ---------------------------------------------------------------------------
# Self-test
# ---------------------------------------------------------------------------
if __name__ == "__main__":
    S, B, D = 8, 2, 32
    MAX_LEN = 64          # small stand-in for max_len=5000
    P = 0.1

    key = jax.random.PRNGKey(0)
    x = jax.random.normal(key, (S, B, D), dtype=jnp.float32)
    pe = make_positional_encoding(MAX_LEN, D)
    ref = x + pe[:S]

    # Eval mode: dropout is identity -> exact match against reference.
    out_eval = jax.block_until_ready(
        positional_encoding_forward(x, pe, p=P, training=False))
    assert out_eval.shape == (S, B, D)
    assert jnp.allclose(out_eval, ref, atol=1e-6, rtol=1e-6), "eval-mode mismatch"

    # Training mode: deterministic check against the exact mask the wrapper
    # derives from the supplied key.
    drop_key = jax.random.PRNGKey(1234)
    out_train = jax.block_until_ready(
        positional_encoding_forward(x, pe, p=P, training=True, rng_key=drop_key))
    u = jax.random.uniform(drop_key, (S, B * D), dtype=jnp.float32).reshape(S, B, D)
    expected = jnp.where(u >= P, ref / (1.0 - P), 0.0)
    assert out_train.shape == (S, B, D)
    assert jnp.allclose(out_train, expected, atol=1e-5, rtol=1e-5), "train-mode mismatch"

    print("KERNEL_OK")
</pallas_src>

<mosaic_0001>
module attributes {stable_mosaic.version = 11 : i64} {
  func.func @_pe_add_kernel(%arg0: i32, %arg1: memref<8x64xf32, #tpu.memory_space<vmem>>, %arg2: memref<8x64xf32, #tpu.memory_space<vmem>>, %arg3: memref<8x64xf32, #tpu.memory_space<vmem>>) attributes {dimension_semantics = [#tpu.dimension_semantics<parallel>], iteration_bounds = array<i64: 1>, scalar_prefetch = 0 : i64, scratch_operands = 0 : i64, tpu.core_type = #tpu.core_type<tc>, window_params = [{transform_indices = @transform_0, window_bounds = array<i64: 8, 64>}, {transform_indices = @transform_1, window_bounds = array<i64: 8, 64>}, {transform_indices = @transform_2, window_bounds = array<i64: 8, 64>}]} {
    %c0 = arith.constant 0 : index
    %c0_0 = arith.constant 0 : index
    %0 = vector.load %arg1[%c0, %c0_0] : memref<8x64xf32, #tpu.memory_space<vmem>>, vector<8x64xf32>
    %c0_1 = arith.constant 0 : index
    %c0_2 = arith.constant 0 : index
    %1 = vector.load %arg2[%c0_1, %c0_2] : memref<8x64xf32, #tpu.memory_space<vmem>>, vector<8x64xf32>
    %2 = arith.addf %0, %1 : vector<8x64xf32>
    %c0_3 = arith.constant 0 : index
    %c0_4 = arith.constant 0 : index
    %3 = vector.load %arg3[%c0_3, %c0_4] : memref<8x64xf32, #tpu.memory_space<vmem>>, vector<8x64xf32>
    tpu.vector_store %arg3[%c0_3, %c0_4], %2 {strides = array<i32>} : memref<8x64xf32, #tpu.memory_space<vmem>>, vector<8x64xf32>,
    return
  }
  func.func @transform_0(%arg0: i32) -> (i32, i32) {
    %c0_i32 = arith.constant 0 : i32
    %c0_i32_0 = arith.constant 0 : i32
    return %arg0, %c0_i32 : i32, i32
  }
  func.func @transform_1(%arg0: i32) -> (i32, i32) {
    %c0_i32 = arith.constant 0 : i32
    %c0_i32_0 = arith.constant 0 : i32
    return %arg0, %c0_i32 : i32, i32
  }
  func.func @transform_2(%arg0: i32) -> (i32, i32) {
    %c0_i32 = arith.constant 0 : i32
    %c0_i32_0 = arith.constant 0 : i32
    return %arg0, %c0_i32 : i32, i32
  }
}

</mosaic_0001>

<llo_original>
// kernel: tpu_custom_call.1
$region0: #{tpu_custom_call.1}
  #allocation0 [shape = 'u32[]', space=smem, size = 0x4, offset = 0x4, fixed_abs, tag = 'smem constant byte address 0x4 - core index']
  #allocation1 [shape = 'u32[144,128]{1,0:T(1,128)}', space=vmem, size = 0x12000, scoped, tag = 'internal scratch']
  %s0 = inlined_call_operand.hbm [shape: f32[8,64], index: 0, kind: input, shape index: {}]
  %s1 = inlined_call_operand.hbm [shape: f32[8,64], index: 1, kind: input, shape index: {}]
  %s2 = inlined_call_operand.hbm [shape: f32[8,64], index: 2, kind: output, shape index: {}]
  %s3 = sld [smem:[#allocation0]]
  $region26: #{tpu_custom_call.1} parent=0
    _
  %s5 = ssub.s32 1, %s3
  %s6 = scalar_select 0, %s5, %s3
  $region1: #{tpu_custom_call.1} parent=0
    #allocation2 [shape = 'u8[4096]{0}', space=vmem, size = 0x1000, scoped, tag = 'input window, operand 0, single buffered']
    #allocation3 [shape = 's32[1]{0}', space=sflag, size = 0x4, scoped, tag = 'scoped memory for tpu_custom_call.1']
    #allocation4 [shape = 's32[1]{0}', space=sflag, size = 0x4, scoped, tag = 'scoped memory for tpu_custom_call.1']
    #allocation5 [shape = 'u8[4096]{0}', space=vmem, size = 0x1000, scoped, tag = 'input window, operand 1, single buffered']
    #allocation6 [shape = 's32[1]{0}', space=sflag, size = 0x4, scoped, tag = 'scoped memory for tpu_custom_call.1']
    #allocation7 [shape = 'u8[4096]{0}', space=vmem, size = 0x1000, scoped, tag = 'output window, operand 0, single buffered']
    %7 = vsyncpa [#allocation3], 0
    %8 = vsyncpa [#allocation6], 0
    %9 = vsyncpa [#allocation4], 0
    // Predicated region
    $region2: #{tpu_custom_call.1} parent=1 // pred_check
      _
    $region3: #{tpu_custom_call.1} parent=1 // pred_check_branch
      %11 = sbr.rel (0) target = $region5
    $region4: #{tpu_custom_call.1} parent=1 // pred_region
      %s13 = ssub.s32 128, 128
      %14 = vsyncadd [#allocation3], %s13
      %s16 = sshll.u32 [#allocation2], 4
      %s17 = int_to_ptr.vmem [resolvable:$true] %s16
      %19 = dma.hbm_to_vmem [thread:$0]  %s0, 128, %s17, [#allocation3]
    $region5: #{tpu_custom_call.1} parent=1 // pred_fallthru
      _
    // Predicated region
    $region6: #{tpu_custom_call.1} parent=1 // pred_check
      _
    $region7: #{tpu_custom_call.1} parent=1 // pred_check_branch
      %21 = sbr.rel (0) target = $region9
    $region8: #{tpu_custom_call.1} parent=1 // pred_region
      %s23 = ssub.s32 128, 128
      %24 = vsyncadd [#allocation6], %s23
      %s26 = sshll.u32 [#allocation5], 4
      %s27 = int_to_ptr.vmem [resolvable:$true] %s26
      %29 = dma.hbm_to_vmem [thread:$0]  %s1, 128, %s27, [#allocation6]
    $region9: #{tpu_custom_call.1} parent=1 // pred_fallthru
      _
    // Predicated region
    $region10: #{tpu_custom_call.1} parent=1 // pred_check
      _
    $region11: #{tpu_custom_call.1} parent=1 // pred_check_branch
      %31 = sbr.rel (0) target = $region13
    $region12: #{tpu_custom_call.1} parent=1 // pred_region
      %32 = dma.done [#allocation3], 128
    $region13: #{tpu_custom_call.1} parent=1 // pred_fallthru
      _
    // Predicated region
    $region14: #{tpu_custom_call.1} parent=1 // pred_check
      _
    $region15: #{tpu_custom_call.1} parent=1 // pred_check_branch
      %34 = sbr.rel (0) target = $region17
    $region16: #{tpu_custom_call.1} parent=1 // pred_region
      %35 = dma.done [#allocation6], 128
    $region17: #{tpu_custom_call.1} parent=1 // pred_fallthru
      _
    %v36 = vld [vmem:[#allocation2] sm:$0xff]
    %v37 = vld [vmem:[#allocation5] sm:$0xff]
    %v38 = vadd.f32 %v36, %v37
    %vm39 = vcmask 523264
    %40 = vst.msk [vmem:[#allocation7] sm:$0xff] %vm39, %v38
    // Predicated region
    $region18: #{tpu_custom_call.1} parent=1 // pred_check
      _
    $region19: #{tpu_custom_call.1} parent=1 // pred_check_branch
      %42 = sbr.rel (0) target = $region21
    $region20: #{tpu_custom_call.1} parent=1 // pred_region
      %s44 = ssub.s32 128, 128
      %45 = vsyncadd [#allocation4], %s44
      %s47 = sshll.u32 [#allocation7], 4
      %s48 = int_to_ptr.vmem [resolvable:$true] %s47
      %50 = dma.vmem_to_hbm [thread:$0]  %s48, 128, %s2, [#allocation4]
    $region21: #{tpu_custom_call.1} parent=1 // pred_fallthru
      _
    // Predicated region
    $region22: #{tpu_custom_call.1} parent=1 // pred_check
      _
    $region23: #{tpu_custom_call.1} parent=1 // pred_check_branch
      %52 = sbr.rel (0) target = $region25
    $region24: #{tpu_custom_call.1} parent=1 // pred_region
      %53 = dma.done [#allocation4], 128
    $region25: #{tpu_custom_call.1} parent=1 // pred_fallthru
      _
    %54 = vsyncpa [#allocation3], 1
    %55 = vsyncpa [#allocation6], 1
    %56 = vsyncpa [#allocation4], 1

</llo_original>
